<compile_context>
chip_gen: v5e
topology: v5e:2x2
jax: 0.10.0
libtpu: 0.0.40
codegen_flags: <defaults>
</compile_context>

<pallas_src>
import functools

import jax
import jax.numpy as jnp
from jax.experimental import pallas as pl
from jax.experimental.pallas import tpu as pltpu


def _net_kernel(a_ref, fw1_ref, sf_ref, pool_ref, wbuf_ref, out_ref, *,
                dim_h1, dim_h2, dsf, dim_fc, dim_out, offs):
    # ---- unpack the resident packed weight slab (8-row-aligned static slices) ----
    b1   = wbuf_ref[offs["b1"]:offs["b1"] + 1, :dim_h1]
    w2   = wbuf_ref[offs["w2"]:offs["w2"] + dim_h1, :dim_h2]
    b2   = wbuf_ref[offs["b2"]:offs["b2"] + 1, :dim_h2]
    wf1h = wbuf_ref[offs["wf1h"]:offs["wf1h"] + dim_h2, :dim_fc]
    wf1s = wbuf_ref[offs["wf1s"]:offs["wf1s"] + dsf, :dim_fc]
    bf1  = wbuf_ref[offs["bf1"]:offs["bf1"] + 1, :dim_fc]
    wf2  = wbuf_ref[offs["wf2"]:offs["wf2"] + dim_fc, :dim_out]
    bf2  = wbuf_ref[offs["bf2"]:offs["bf2"] + 1, :dim_out]

    A_bd = a_ref[...]      # (GN, GN) block-diagonal, row-normalized (precomputed host-side)
    xw1 = fw1_ref[...]     # (GN, dim_h1) = feat @ W1 (pre-folded host-side)

    # ---- GCN layer 1: relu(A @ (X W1) + b1)  (== relu((A X) W1 + b1)) ----
    h1 = jnp.maximum(jnp.dot(A_bd, xw1, preferred_element_type=jnp.float32) + b1, 0.0)

    # ---- GCN layer 2: relu((A h1) W2 + b2) ----
    agg2 = jnp.dot(A_bd, h1, preferred_element_type=jnp.float32)
    h2 = jnp.maximum(jnp.dot(agg2, w2, preferred_element_type=jnp.float32) + b2, 0.0)

    # ---- dgl.mean_nodes: per-graph mean over N nodes via a constant pooling matmul ----
    # TODO(synk): assumes each dense-batched graph has exactly N real nodes (no padded
    # dummy nodes); DGL's per-graph mean over a variable node count is not modeled.
    hg = jnp.dot(pool_ref[...], h2, preferred_element_type=jnp.float32)       # (G, dim_h2)

    # ---- fc1 on concat([hg, self_feat], dim=1), expressed as a split matmul + relu ----
    sf = sf_ref[...]                                                          # (G, dsf)
    o1 = jnp.maximum(
        jnp.dot(hg, wf1h, preferred_element_type=jnp.float32)
        + jnp.dot(sf, wf1s, preferred_element_type=jnp.float32)
        + bf1, 0.0)                                                           # (G, dim_fc)

    # ---- fc2 (no activation): one store per grid step for all G graphs ----
    out_ref[...] = jnp.dot(o1, wf2, preferred_element_type=jnp.float32) + bf2


def _pack_params(params, dim_h2):
    """Concatenate weights/biases (except the pre-folded W1) into one (rows, 128) f32
    slab; every block is padded to a multiple of 8 rows so in-kernel static slices start
    on a sublane-tile boundary."""
    blocks = [
        ("b1", params["b1"]), ("w2", params["w2"]), ("b2", params["b2"]),
        ("wf1h", params["wf1"][:dim_h2]), ("wf1s", params["wf1"][dim_h2:]),
        ("bf1", params["bf1"]), ("wf2", params["wf2"]), ("bf2", params["bf2"]),
    ]
    pad_w = max(128, max(int(a.shape[1]) for _, a in blocks))
    offs, rows, r = {}, [], 0
    for name, a in blocks:
        a = jnp.asarray(a, jnp.float32)
        nr = int(a.shape[0])
        nr_pad = -(-nr // 8) * 8                       # round up to 8 rows (sublane tile)
        offs[name] = r
        rows.append(jnp.pad(a, ((0, nr_pad - nr), (0, pad_w - int(a.shape[1])))))
        r += nr_pad
    return jnp.concatenate(rows, axis=0), offs


def _pick_graphs_per_step(B, N, target_rows=256):
    """Largest divisor G of B with G*N <= target_rows and G sublane-aligned (or == B).
    The kernel is fixed-overhead bound, so fewer / fatter grid steps win; GN=256 fills
    the 256-wide MXU on v6e/v7x, and v5e simply runs two 128-row passes (no loss)."""
    best = None
    for g in range(1, B + 1):
        if B % g == 0 and g * N <= target_rows and (g == B or g % 8 == 0):
            best = g
    return best if best is not None else B


@functools.partial(jax.jit, static_argnames=("graphs_per_step",))
def net_forward(adj, feat, self_feat, params, graphs_per_step=None):
    """adj: [B,N,N] row-normalized; feat: [B,N,dim_in]; self_feat: [B,dim_self_feat]."""
    B, N, _ = adj.shape
    dim_in = feat.shape[-1]
    dsf = self_feat.shape[-1]
    dim_h1 = params["w1"].shape[-1]
    dim_h2 = params["w2"].shape[-1]     # fc1 split derived from gc2 width
    dim_fc = params["wf1"].shape[-1]
    dim_out = params["wf2"].shape[-1]

    # On v7x, pass graphs_per_step=B//2 to get an even grid across the two TensorCores;
    # on v5e/v6e the single-TC default (fewest steps) is preferred.
    G = graphs_per_step if graphs_per_step is not None else _pick_graphs_per_step(B, N)
    assert B % G == 0, (B, G)
    GN = G * N
    S = B // G

    prec = jax.lax.Precision.HIGHEST

    # ---- host/XLA-side prep (traced once under jit) ----
    # 1) Block-diagonal adjacency per grid step: (S, G*N, G*N) flattened to (S*GN, GN).
    adj_g = adj.reshape(S, G, N, N).astype(jnp.float32)
    eye_g = jnp.eye(G, dtype=jnp.float32)
    a_bd = (adj_g[:, :, :, None, :] * eye_g[None, :, None, :, None]).reshape(S * GN, GN)
    # 2) Pre-fold the first GCN linear:  A (X W1) == (A X) W1.
    feat_w1 = jnp.dot(feat.reshape(B * N, dim_in).astype(jnp.float32),
                      jnp.asarray(params["w1"], jnp.float32), precision=prec)
    # 3) Constant per-graph mean-pooling matrix (G, GN), resident across the grid.
    pool = jnp.repeat(eye_g, N, axis=1) / jnp.float32(N)
    # 4) Packed, 8-row-aligned weight slab (one resident pipeline channel).
    wbuf, offs = _pack_params(params, dim_h2)

    kernel = functools.partial(
        _net_kernel, dim_h1=dim_h1, dim_h2=dim_h2, dsf=dsf,
        dim_fc=dim_fc, dim_out=dim_out, offs=offs)

    out = pl.pallas_call(
        kernel,
        out_shape=jax.ShapeDtypeStruct((B, dim_out), jnp.float32),
        grid=(S,),
        in_specs=[
            pl.BlockSpec((GN, GN), lambda b: (b, 0)),        # block-diag adjacency tile
            pl.BlockSpec((GN, dim_h1), lambda b: (b, 0)),    # pre-folded feat @ W1
            pl.BlockSpec((G, dsf), lambda b: (b, 0)),        # self features
            pl.BlockSpec((G, GN), lambda b: (0, 0)),         # pooling matrix (resident)
            pl.BlockSpec(wbuf.shape, lambda b: (0, 0)),      # packed weights (resident)
        ],
        out_specs=pl.BlockSpec((G, dim_out), lambda b: (b, 0)),
        compiler_params=pltpu.CompilerParams(
            dimension_semantics=("parallel",)),
    )(a_bd, feat_w1, self_feat.astype(jnp.float32), pool, wbuf)
    return out


def net_forward_ref(adj, feat, self_feat, params):
    """Pure-JAX reference for correctness checking."""
    prec = jax.lax.Precision.HIGHEST
    agg1 = jnp.einsum("bij,bjf->bif", adj, feat, precision=prec)
    h1 = jax.nn.relu(jnp.einsum("bif,fo->bio", agg1, params["w1"], precision=prec)
                     + params["b1"])
    agg2 = jnp.einsum("bij,bjf->bif", adj, h1, precision=prec)
    h2 = jax.nn.relu(jnp.einsum("bif,fo->bio", agg2, params["w2"], precision=prec)
                     + params["b2"])
    hg = jnp.mean(h2, axis=1)                               # (B, 16)
    cat = jnp.concatenate([hg, self_feat], axis=1)          # (B, 16 + dsf)
    o1 = jax.nn.relu(jnp.dot(cat, params["wf1"], precision=prec) + params["bf1"])
    return jnp.dot(o1, params["wf2"], precision=prec) + params["bf2"]


def init_params(key, dim_in, dim_out, dim_self_feat):
    ks = jax.random.split(key, 8)
    scale = 0.1
    return {
        "w1": scale * jax.random.normal(ks[0], (dim_in, 32), jnp.float32),
        "b1": scale * jax.random.normal(ks[1], (1, 32), jnp.float32),
        "w2": scale * jax.random.normal(ks[2], (32, 16), jnp.float32),
        "b2": scale * jax.random.normal(ks[3], (1, 16), jnp.float32),
        "wf1": scale * jax.random.normal(ks[4], (16 + dim_self_feat, 10), jnp.float32),
        "bf1": scale * jax.random.normal(ks[5], (1, 10), jnp.float32),
        "wf2": scale * jax.random.normal(ks[6], (10, dim_out), jnp.float32),
        "bf2": scale * jax.random.normal(ks[7], (1, dim_out), jnp.float32),
    }


if __name__ == "__main__":
    B, N = 32, 8               # 32 graphs, 8 nodes each (dense batching) -> G=32, grid=1
    dim_in, dim_out, dsf = 4, 3, 4

    key = jax.random.PRNGKey(0)
    k_adj, k_feat, k_sf, k_par = jax.random.split(key, 4)

    # Random graph with guaranteed self-loops, then row-normalize so that A @ H is the
    # mean over in-neighbors (DGL copy_u + mean reduce).
    # TODO(synk): DGL leaves zero-in-degree nodes' h untouched; not modeled (self-loops
    # guarantee every node has >= 1 in-edge).
    raw = jax.random.bernoulli(k_adj, p=0.4, shape=(B, N, N)).astype(jnp.float32)
    raw = jnp.minimum(raw + jnp.eye(N, dtype=jnp.float32)[None], 1.0)
    adj = raw / jnp.sum(raw, axis=-1, keepdims=True)

    feat = jax.random.normal(k_feat, (B, N, dim_in), jnp.float32)
    self_feat = jax.random.normal(k_sf, (B, dsf), jnp.float32)
    params = init_params(k_par, dim_in, dim_out, dsf)

    out = jax.block_until_ready(net_forward(adj, feat, self_feat, params))
    ref = jax.block_until_ready(net_forward_ref(adj, feat, self_feat, params))

    assert out.shape == (B, dim_out), out.shape
    assert jnp.allclose(out, ref, atol=1e-4, rtol=1e-4), (out, ref)
    print("KERNEL_OK")
</pallas_src>

<mosaic_0001>
module attributes {stable_mosaic.version = 11 : i64} {
  func.func @_net_kernel(%arg0: i32, %arg1: memref<256x256xf32, #tpu.memory_space<vmem>>, %arg2: memref<256x32xf32, #tpu.memory_space<vmem>>, %arg3: memref<32x4xf32, #tpu.memory_space<vmem>>, %arg4: memref<32x256xf32, #tpu.memory_space<vmem>>, %arg5: memref<104x128xf32, #tpu.memory_space<vmem>>, %arg6: memref<32x3xf32, #tpu.memory_space<vmem>>) attributes {dimension_semantics = [#tpu.dimension_semantics<parallel>], iteration_bounds = array<i64: 1>, scalar_prefetch = 0 : i64, scratch_operands = 0 : i64, tpu.core_type = #tpu.core_type<tc>, window_params = [{transform_indices = @transform_0, window_bounds = array<i64: 256, 256>}, {transform_indices = @transform_1, window_bounds = array<i64: 256, 32>}, {transform_indices = @transform_2, window_bounds = array<i64: 32, 4>}, {pipeline_mode = #tpu.pipeline_mode<synchronous>, transform_indices = @transform_3, window_bounds = array<i64: 32, 256>}, {pipeline_mode = #tpu.pipeline_mode<synchronous>, transform_indices = @transform_4, window_bounds = array<i64: 104, 128>}, {transform_indices = @transform_5, window_bounds = array<i64: 32, 3>}]} {
    %c0 = arith.constant 0 : index
    %c0_0 = arith.constant 0 : index
    %0 = vector.load %arg5[%c0, %c0_0] : memref<104x128xf32, #tpu.memory_space<vmem>>, vector<1x32xf32>
    %c8 = arith.constant 8 : index
    %c0_1 = arith.constant 0 : index
    %1 = vector.load %arg5[%c8, %c0_1] : memref<104x128xf32, #tpu.memory_space<vmem>>, vector<32x16xf32>
    %c40 = arith.constant 40 : index
    %c0_2 = arith.constant 0 : index
    %2 = vector.load %arg5[%c40, %c0_2] : memref<104x128xf32, #tpu.memory_space<vmem>>, vector<1x16xf32>
    %c48 = arith.constant 48 : index
    %c0_3 = arith.constant 0 : index
    %3 = vector.load %arg5[%c48, %c0_3] : memref<104x128xf32, #tpu.memory_space<vmem>>, vector<16x10xf32>
    %c64 = arith.constant 64 : index
    %c0_4 = arith.constant 0 : index
    %4 = vector.load %arg5[%c64, %c0_4] : memref<104x128xf32, #tpu.memory_space<vmem>>, vector<4x10xf32>
    %c72 = arith.constant 72 : index
    %c0_5 = arith.constant 0 : index
    %5 = vector.load %arg5[%c72, %c0_5] : memref<104x128xf32, #tpu.memory_space<vmem>>, vector<1x10xf32>
    %c80 = arith.constant 80 : index
    %c0_6 = arith.constant 0 : index
    %6 = vector.load %arg5[%c80, %c0_6] : memref<104x128xf32, #tpu.memory_space<vmem>>, vector<10x3xf32>
    %c96 = arith.constant 96 : index
    %c0_7 = arith.constant 0 : index
    %7 = vector.load %arg5[%c96, %c0_7] : memref<104x128xf32, #tpu.memory_space<vmem>>, vector<1x3xf32>
    %c0_8 = arith.constant 0 : index
    %c0_9 = arith.constant 0 : index
    %8 = vector.load %arg1[%c0_8, %c0_9] : memref<256x256xf32, #tpu.memory_space<vmem>>, vector<256x256xf32>
    %c0_10 = arith.constant 0 : index
    %c0_11 = arith.constant 0 : index
    %9 = vector.load %arg2[%c0_10, %c0_11] : memref<256x32xf32, #tpu.memory_space<vmem>>, vector<256x32xf32>
    %cst = arith.constant dense<0.000000e+00> : vector<256x32xf32>
    %10 = tpu.matmul %8, %9, %cst {dimension_numbers = #tpu.dot_dimension_numbers<[1], [0], [0], [1], [0, 0, 1, 1], [], []>} : vector<256x256xf32>, vector<256x32xf32>, vector<256x32xf32> -> vector<256x32xf32>
    %11 = vector.broadcast %0 : vector<1x32xf32> to vector<256x32xf32>
    %12 = arith.addf %10, %11 : vector<256x32xf32>
    %cst_12 = arith.constant 0.000000e+00 : f32
    %13 = vector.broadcast %cst_12 : f32 to vector<256x32xf32>
    %14 = arith.maximumf %12, %13 : vector<256x32xf32>
    %cst_13 = arith.constant dense<0.000000e+00> : vector<256x32xf32>
    %15 = tpu.matmul %8, %14, %cst_13 {dimension_numbers = #tpu.dot_dimension_numbers<[1], [0], [0], [1], [0, 0, 1, 1], [], []>} : vector<256x256xf32>, vector<256x32xf32>, vector<256x32xf32> -> vector<256x32xf32>
    %cst_14 = arith.constant dense<0.000000e+00> : vector<256x16xf32>
    %16 = tpu.matmul %15, %1, %cst_14 {dimension_numbers = #tpu.dot_dimension_numbers<[1], [0], [0], [1], [0, 0, 1, 1], [], []>} : vector<256x32xf32>, vector<32x16xf32>, vector<256x16xf32> -> vector<256x16xf32>
    %17 = vector.broadcast %2 : vector<1x16xf32> to vector<256x16xf32>
    %18 = arith.addf %16, %17 : vector<256x16xf32>
    %cst_15 = arith.constant 0.000000e+00 : f32
    %19 = vector.broadcast %cst_15 : f32 to vector<256x16xf32>
    %20 = arith.maximumf %18, %19 : vector<256x16xf32>
    %c0_16 = arith.constant 0 : index
    %c0_17 = arith.constant 0 : index
    %21 = vector.load %arg4[%c0_16, %c0_17] : memref<32x256xf32, #tpu.memory_space<vmem>>, vector<32x256xf32>
    %cst_18 = arith.constant dense<0.000000e+00> : vector<32x16xf32>
    %22 = tpu.matmul %21, %20, %cst_18 {dimension_numbers = #tpu.dot_dimension_numbers<[1], [0], [0], [1], [0, 0, 1, 1], [], []>} : vector<32x256xf32>, vector<256x16xf32>, vector<32x16xf32> -> vector<32x16xf32>
    %c0_19 = arith.constant 0 : index
    %c0_20 = arith.constant 0 : index
    %23 = vector.load %arg3[%c0_19, %c0_20] : memref<32x4xf32, #tpu.memory_space<vmem>>, vector<32x4xf32>
    %cst_21 = arith.constant dense<0.000000e+00> : vector<32x10xf32>
    %24 = tpu.matmul %22, %3, %cst_21 {dimension_numbers = #tpu.dot_dimension_numbers<[1], [0], [0], [1], [0, 0, 1, 1], [], []>} : vector<32x16xf32>, vector<16x10xf32>, vector<32x10xf32> -> vector<32x10xf32>
    %cst_22 = arith.constant dense<0.000000e+00> : vector<32x10xf32>
    %25 = tpu.matmul %23, %4, %cst_22 {dimension_numbers = #tpu.dot_dimension_numbers<[1], [0], [0], [1], [0, 0, 1, 1], [], []>} : vector<32x4xf32>, vector<4x10xf32>, vector<32x10xf32> -> vector<32x10xf32>
    %26 = arith.addf %24, %25 : vector<32x10xf32>
    %27 = vector.broadcast %5 : vector<1x10xf32> to vector<32x10xf32>
    %28 = arith.addf %26, %27 : vector<32x10xf32>
    %cst_23 = arith.constant 0.000000e+00 : f32
    %29 = vector.broadcast %cst_23 : f32 to vector<32x10xf32>
    %30 = arith.maximumf %28, %29 : vector<32x10xf32>
    %cst_24 = arith.constant dense<0.000000e+00> : vector<32x3xf32>
    %31 = tpu.matmul %30, %6, %cst_24 {dimension_numbers = #tpu.dot_dimension_numbers<[1], [0], [0], [1], [0, 0, 1, 1], [], []>} : vector<32x10xf32>, vector<10x3xf32>, vector<32x3xf32> -> vector<32x3xf32>
    %32 = vector.broadcast %7 : vector<1x3xf32> to vector<32x3xf32>
    %33 = arith.addf %31, %32 : vector<32x3xf32>
    %c0_25 = arith.constant 0 : index
    %c0_26 = arith.constant 0 : index
    %34 = vector.load %arg6[%c0_25, %c0_26] : memref<32x3xf32, #tpu.memory_space<vmem>>, vector<32x3xf32>
    tpu.vector_store %arg6[%c0_25, %c0_26], %33 {strides = array<i32>} : memref<32x3xf32, #tpu.memory_space<vmem>>, vector<32x3xf32>,
    return
  }
  func.func @transform_0(%arg0: i32) -> (i32, i32) {
    %c0_i32 = arith.constant 0 : i32
    %c0_i32_0 = arith.constant 0 : i32
    return %arg0, %c0_i32 : i32, i32
  }
  func.func @transform_1(%arg0: i32) -> (i32, i32) {
    %c0_i32 = arith.constant 0 : i32
    %c0_i32_0 = arith.constant 0 : i32
    return %arg0, %c0_i32 : i32, i32
  }
  func.func @transform_2(%arg0: i32) -> (i32, i32) {
    %c0_i32 = arith.constant 0 : i32
    %c0_i32_0 = arith.constant 0 : i32
    return %arg0, %c0_i32 : i32, i32
  }
  func.func @transform_3(%arg0: i32) -> (i32, i32) {
    %c0_i32 = arith.constant 0 : i32
    %c0_i32_0 = arith.constant 0 : i32
    %c0_i32_1 = arith.constant 0 : i32
    return %c0_i32, %c0_i32_0 : i32, i32
  }
  func.func @transform_4(%arg0: i32) -> (i32, i32) {
    %c0_i32 = arith.constant 0 : i32
    %c0_i32_0 = arith.constant 0 : i32
    %c0_i32_1 = arith.constant 0 : i32
    return %c0_i32, %c0_i32_0 : i32, i32
  }
  func.func @transform_5(%arg0: i32) -> (i32, i32) {
    %c0_i32 = arith.constant 0 : i32
    %c0_i32_0 = arith.constant 0 : i32
    return %arg0, %c0_i32 : i32, i32
  }
}

</mosaic_0001>

<llo_original>
// kernel: net_forward.1
$region0: #{net_forward.1}
  #allocation0 [shape = 'u32[]', space=smem, size = 0x4, offset = 0x4, fixed_abs, tag = 'smem constant byte address 0x4 - core index']
  #allocation1 [shape = 'u32[72,128]{1,0:T(1,128)}', space=vmem, size = 0x9000, scoped, tag = 'internal scratch']
  %s0 = inlined_call_operand.vmem [shape: f32[256,256], index: 0, kind: input, shape index: {}]
  %s1 = inlined_call_operand.vmem [shape: f32[256,32], index: 1, kind: input, shape index: {}]
  %s2 = inlined_call_operand.vmem [shape: f32[32,4], index: 2, kind: input, shape index: {}]
  %s3 = inlined_call_operand.vmem [shape: f32[32,256], index: 3, kind: input, shape index: {}]
  %s4 = inlined_call_operand.vmem [shape: f32[104,128], index: 4, kind: input, shape index: {}]
  %s5 = inlined_call_operand.vmem [shape: f32[32,3], index: 5, kind: output, shape index: {}]
  %s6 = sld [smem:[#allocation0]]
  $region30: #{net_forward.1} parent=0
    _
  %s8 = ssub.s32 1, %s6
  %s9 = scalar_select 0, %s8, %s6
  // Predicated region
  $region2: #{net_forward.1} parent=0 // pred_check
    _
  $region3: #{net_forward.1} parent=0 // pred_check_branch
    %11 = sbr.rel (0) target = $region5
  $region4: #{net_forward.1} parent=0 // pred_region
    _
  $region5: #{net_forward.1} parent=0 // pred_fallthru
    _
  // Predicated region
  $region6: #{net_forward.1} parent=0 // pred_check
    _
  $region7: #{net_forward.1} parent=0 // pred_check_branch
    %13 = sbr.rel (0) target = $region9
  $region8: #{net_forward.1} parent=0 // pred_region
    _
  $region9: #{net_forward.1} parent=0 // pred_fallthru
    _
  // Predicated region
  $region10: #{net_forward.1} parent=0 // pred_check
    _
  $region11: #{net_forward.1} parent=0 // pred_check_branch
    %15 = sbr.rel (0) target = $region13
  $region12: #{net_forward.1} parent=0 // pred_region
    _
  $region13: #{net_forward.1} parent=0 // pred_fallthru
    _
  // Predicated region
  $region14: #{net_forward.1} parent=0 // pred_check
    _
  $region15: #{net_forward.1} parent=0 // pred_check_branch
    %17 = sbr.rel (0) target = $region17
  $region16: #{net_forward.1} parent=0 // pred_region
    _
  $region17: #{net_forward.1} parent=0 // pred_fallthru
    _
  // Predicated region
  $region18: #{net_forward.1} parent=0 // pred_check
    _
  $region19: #{net_forward.1} parent=0 // pred_check_branch
    %19 = sbr.rel (0) target = $region21
  $region20: #{net_forward.1} parent=0 // pred_region
    _
  $region21: #{net_forward.1} parent=0 // pred_fallthru
    _
  %v20 = vld [vmem:[%s4] sm:$0x1]
  %v21 = vld [vmem:[%s4 + $0x8] sm:$0xff]
  %v22 = vld [vmem:[%s4 + $0x10] sm:$0xff]
  %v23 = vld [vmem:[%s4 + $0x18] sm:$0xff]
  %v24 = vld [vmem:[%s4 + $0x20] sm:$0xff]
  %v25 = vld [vmem:[%s4 + $0x28] sm:$0x1]
  %v26 = vld [vmem:[%s4 + $0x30] sm:$0xff]
  %v27 = vld [vmem:[%s4 + $0x38] sm:$0xff]
  %v28 = vld [vmem:[%s4 + $0x40] sm:$0xf]
  %v29 = vld [vmem:[%s4 + $0x48] sm:$0x1]
  %v30 = vld [vmem:[%s4 + $0x50] sm:$0xff]
  %v31 = vld [vmem:[%s4 + $0x58] sm:$0x3]
  %v32 = vld [vmem:[%s4 + $0x60] sm:$0x1]
  %v33 = vld [vmem:[%s0] sm:$0xff]
  %v34 = vld [vmem:[%s0 + $0x8] sm:$0xff]
  %v35 = vld [vmem:[%s0 + $0x10] sm:$0xff]
  %v36 = vld [vmem:[%s0 + $0x18] sm:$0xff]
  %v37 = vld [vmem:[%s0 + $0x20] sm:$0xff]
  %v38 = vld [vmem:[%s0 + $0x28] sm:$0xff]
  %v39 = vld [vmem:[%s0 + $0x30] sm:$0xff]
  %v40 = vld [vmem:[%s0 + $0x38] sm:$0xff]
  %v41 = vld [vmem:[%s0 + $0x40] sm:$0xff]
  %v42 = vld [vmem:[%s0 + $0x48] sm:$0xff]
  %v43 = vld [vmem:[%s0 + $0x50] sm:$0xff]
  %v44 = vld [vmem:[%s0 + $0x58] sm:$0xff]
  %v45 = vld [vmem:[%s0 + $0x60] sm:$0xff]
  %v46 = vld [vmem:[%s0 + $0x68] sm:$0xff]
  %v47 = vld [vmem:[%s0 + $0x70] sm:$0xff]
  %v48 = vld [vmem:[%s0 + $0x78] sm:$0xff]
  %v49 = vld [vmem:[%s0 + $0x80] sm:$0xff]
  %v50 = vld [vmem:[%s0 + $0x88] sm:$0xff]
  %v51 = vld [vmem:[%s0 + $0x90] sm:$0xff]
  %v52 = vld [vmem:[%s0 + $0x98] sm:$0xff]
  %v53 = vld [vmem:[%s0 + $0xa0] sm:$0xff]
  %v54 = vld [vmem:[%s0 + $0xa8] sm:$0xff]
  %v55 = vld [vmem:[%s0 + $0xb0] sm:$0xff]
  %v56 = vld [vmem:[%s0 + $0xb8] sm:$0xff]
  %v57 = vld [vmem:[%s0 + $0xc0] sm:$0xff]
  %v58 = vld [vmem:[%s0 + $0xc8] sm:$0xff]
  %v59 = vld [vmem:[%s0 + $0xd0] sm:$0xff]
  %v60 = vld [vmem:[%s0 + $0xd8] sm:$0xff]
  %v61 = vld [vmem:[%s0 + $0xe0] sm:$0xff]
  %v62 = vld [vmem:[%s0 + $0xe8] sm:$0xff]
  %v63 = vld [vmem:[%s0 + $0xf0] sm:$0xff]
  %v64 = vld [vmem:[%s0 + $0xf8] sm:$0xff]
  %v65 = vld [vmem:[%s0 + $0x100] sm:$0xff]
  %v66 = vld [vmem:[%s0 + $0x108] sm:$0xff]
  %v67 = vld [vmem:[%s0 + $0x110] sm:$0xff]
  %v68 = vld [vmem:[%s0 + $0x118] sm:$0xff]
  %v69 = vld [vmem:[%s0 + $0x120] sm:$0xff]
  %v70 = vld [vmem:[%s0 + $0x128] sm:$0xff]
  %v71 = vld [vmem:[%s0 + $0x130] sm:$0xff]
  %v72 = vld [vmem:[%s0 + $0x138] sm:$0xff]
  %v73 = vld [vmem:[%s0 + $0x140] sm:$0xff]
  %v74 = vld [vmem:[%s0 + $0x148] sm:$0xff]
  %v75 = vld [vmem:[%s0 + $0x150] sm:$0xff]
  %v76 = vld [vmem:[%s0 + $0x158] sm:$0xff]
  %v77 = vld [vmem:[%s0 + $0x160] sm:$0xff]
  %v78 = vld [vmem:[%s0 + $0x168] sm:$0xff]
  %v79 = vld [vmem:[%s0 + $0x170] sm:$0xff]
  %v80 = vld [vmem:[%s0 + $0x178] sm:$0xff]
  %v81 = vld [vmem:[%s0 + $0x180] sm:$0xff]
  %v82 = vld [vmem:[%s0 + $0x188] sm:$0xff]
  %v83 = vld [vmem:[%s0 + $0x190] sm:$0xff]
  %v84 = vld [vmem:[%s0 + $0x198] sm:$0xff]
  %v85 = vld [vmem:[%s0 + $0x1a0] sm:$0xff]
  %v86 = vld [vmem:[%s0 + $0x1a8] sm:$0xff]
  %v87 = vld [vmem:[%s0 + $0x1b0] sm:$0xff]
  %v88 = vld [vmem:[%s0 + $0x1b8] sm:$0xff]
  %v89 = vld [vmem:[%s0 + $0x1c0] sm:$0xff]
  %v90 = vld [vmem:[%s0 + $0x1c8] sm:$0xff]
  %v91 = vld [vmem:[%s0 + $0x1d0] sm:$0xff]
  %v92 = vld [vmem:[%s0 + $0x1d8] sm:$0xff]
  %v93 = vld [vmem:[%s0 + $0x1e0] sm:$0xff]
  %v94 = vld [vmem:[%s0 + $0x1e8] sm:$0xff]
  %v95 = vld [vmem:[%s0 + $0x1f0] sm:$0xff]
  %v96 = vld [vmem:[%s0 + $0x1f8] sm:$0xff]
  %v97 = vld [vmem:[%s1] sm:$0xff]
  %v98 = vld [vmem:[%s1 + $0x8] sm:$0xff]
  %v99 = vld [vmem:[%s1 + $0x10] sm:$0xff]
  %v100 = vld [vmem:[%s1 + $0x18] sm:$0xff]
  %v101 = vld [vmem:[%s1 + $0x20] sm:$0xff]
  %v102 = vld [vmem:[%s1 + $0x28] sm:$0xff]
  %v103 = vld [vmem:[%s1 + $0x30] sm:$0xff]
  %v104 = vld [vmem:[%s1 + $0x38] sm:$0xff]
  %v105 = vld [vmem:[%s1 + $0x40] sm:$0xff]
  %v106 = vld [vmem:[%s1 + $0x48] sm:$0xff]
  %v107 = vld [vmem:[%s1 + $0x50] sm:$0xff]
  %v108 = vld [vmem:[%s1 + $0x58] sm:$0xff]
  %v109 = vld [vmem:[%s1 + $0x60] sm:$0xff]
  %v110 = vld [vmem:[%s1 + $0x68] sm:$0xff]
  %v111 = vld [vmem:[%s1 + $0x70] sm:$0xff]
  %v112 = vld [vmem:[%s1 + $0x78] sm:$0xff]
  %v113 = vld [vmem:[%s1 + $0x80] sm:$0xff]
  %v114 = vld [vmem:[%s1 + $0x88] sm:$0xff]
  %v115 = vld [vmem:[%s1 + $0x90] sm:$0xff]
  %v116 = vld [vmem:[%s1 + $0x98] sm:$0xff]
  %v117 = vld [vmem:[%s1 + $0xa0] sm:$0xff]
  %v118 = vld [vmem:[%s1 + $0xa8] sm:$0xff]
  %v119 = vld [vmem:[%s1 + $0xb0] sm:$0xff]
  %v120 = vld [vmem:[%s1 + $0xb8] sm:$0xff]
  %v121 = vld [vmem:[%s1 + $0xc0] sm:$0xff]
  %v122 = vld [vmem:[%s1 + $0xc8] sm:$0xff]
  %v123 = vld [vmem:[%s1 + $0xd0] sm:$0xff]
  %v124 = vld [vmem:[%s1 + $0xd8] sm:$0xff]
  %v125 = vld [vmem:[%s1 + $0xe0] sm:$0xff]
  %v126 = vld [vmem:[%s1 + $0xe8] sm:$0xff]
  %v127 = vld [vmem:[%s1 + $0xf0] sm:$0xff]
  %v128 = vld [vmem:[%s1 + $0xf8] sm:$0xff]
  %v129 = vperm.slane %v20, 0
  %130 = vmatpush.msra.mxu0 %v112
  %131 = vmatpush.msra.mxu0 %v111
  %132 = vmatpush.msra.mxu0 %v110
  %133 = vmatpush.msra.mxu0 %v109
  %134 = vmatpush.msra.mxu0 %v108
  %135 = vmatpush.msra.mxu0 %v107
  %136 = vmatpush.msra.mxu0 %v106
  %137 = vmatpush.msra.mxu0 %v105
  %138 = vmatpush.msra.mxu0 %v104
  %139 = vmatpush.msra.mxu0 %v103
  %140 = vmatpush.msra.mxu0 %v102
  %141 = vmatpush.msra.mxu0 %v101
  %142 = vmatpush.msra.mxu0 %v100
  %143 = vmatpush.msra.mxu0 %v99
  %144 = vmatpush.msra.mxu0 %v98
  %145 = vmatpush.msra.mxu0 %v97
  %146 = vmatmul.f32.gmra.mxu0 %v33
  %v147 = vpop.f32.mrf.mxu0
  %v148 = vadd.f32 %v129, %v147
  %149 = vmatmul.f32.gmra.mxu0 %v35
  %v150 = vpop.f32.mrf.mxu0
  %v151 = vadd.f32 %v129, %v150
  %152 = vmatmul.f32.gmra.mxu0 %v37
  %v153 = vpop.f32.mrf.mxu0
  %v154 = vadd.f32 %v129, %v153
  %155 = vmatmul.f32.gmra.mxu0 %v39
  %v156 = vpop.f32.mrf.mxu0
  %v157 = vadd.f32 %v129, %v156
  %158 = vmatmul.f32.gmra.mxu0 %v41
  %v159 = vpop.f32.mrf.mxu0
  %v160 = vadd.f32 %v129, %v159
  %161 = vmatmul.f32.gmra.mxu0 %v43
  %v162 = vpop.f32.mrf.mxu0
  %v163 = vadd.f32 %v129, %v162
  %164 = vmatmul.f32.gmra.mxu0 %v45
  %v165 = vpop.f32.mrf.mxu0
  %v166 = vadd.f32 %v129, %v165
  %167 = vmatmul.f32.gmra.mxu0 %v47
  %v168 = vpop.f32.mrf.mxu0
  %v169 = vadd.f32 %v129, %v168
  %170 = vmatmul.f32.gmra.mxu0 %v49
  %v171 = vpop.f32.mrf.mxu0
  %v172 = vadd.f32 %v129, %v171
  %173 = vmatmul.f32.gmra.mxu0 %v51
  %v174 = vpop.f32.mrf.mxu0
  %v175 = vadd.f32 %v129, %v174
  %176 = vmatmul.f32.gmra.mxu0 %v53
  %v177 = vpop.f32.mrf.mxu0
  %v178 = vadd.f32 %v129, %v177
  %179 = vmatmul.f32.gmra.mxu0 %v55
  %v180 = vpop.f32.mrf.mxu0
  %v181 = vadd.f32 %v129, %v180
  %182 = vmatmul.f32.gmra.mxu0 %v57
  %v183 = vpop.f32.mrf.mxu0
  %v184 = vadd.f32 %v129, %v183
  %185 = vmatmul.f32.gmra.mxu0 %v59
  %v186 = vpop.f32.mrf.mxu0
  %v187 = vadd.f32 %v129, %v186
  %188 = vmatmul.f32.gmra.mxu0 %v61
  %v189 = vpop.f32.mrf.mxu0
  %v190 = vadd.f32 %v129, %v189
  %191 = vmatmul.f32.gmra.mxu0 %v63
  %v192 = vpop.f32.mrf.mxu0
  %v193 = vadd.f32 %v129, %v192
  %194 = vmatmul.f32.gmra.mxu0 %v65
  %v195 = vpop.f32.mrf.mxu0
  %v196 = vadd.f32 %v129, %v195
  %197 = vmatmul.f32.gmra.mxu0 %v67
  %v198 = vpop.f32.mrf.mxu0
  %v199 = vadd.f32 %v129, %v198
  %200 = vmatmul.f32.gmra.mxu0 %v69
  %v201 = vpop.f32.mrf.mxu0
  %v202 = vadd.f32 %v129, %v201
  %203 = vmatmul.f32.gmra.mxu0 %v71
  %v204 = vpop.f32.mrf.mxu0
  %v205 = vadd.f32 %v129, %v204
  %206 = vmatmul.f32.gmra.mxu0 %v73
  %v207 = vpop.f32.mrf.mxu0
  %v208 = vadd.f32 %v129, %v207
  %209 = vmatmul.f32.gmra.mxu0 %v75
  %v210 = vpop.f32.mrf.mxu0
  %v211 = vadd.f32 %v129, %v210
  %212 = vmatmul.f32.gmra.mxu0 %v77
  %v213 = vpop.f32.mrf.mxu0
  %v214 = vadd.f32 %v129, %v213
  %215 = vmatmul.f32.gmra.mxu0 %v79
  %v216 = vpop.f32.mrf.mxu0
  %v217 = vadd.f32 %v129, %v216
  %218 = vmatmul.f32.gmra.mxu0 %v81
  %v219 = vpop.f32.mrf.mxu0
  %v220 = vadd.f32 %v129, %v219
  %221 = vmatmul.f32.gmra.mxu0 %v83
  %v222 = vpop.f32.mrf.mxu0
  %v223 = vadd.f32 %v129, %v222
  %224 = vmatmul.f32.gmra.mxu0 %v85
  %v225 = vpop.f32.mrf.mxu0
  %v226 = vadd.f32 %v129, %v225
  %227 = vmatmul.f32.gmra.mxu0 %v87
  %v228 = vpop.f32.mrf.mxu0
  %v229 = vadd.f32 %v129, %v228
  %230 = vmatmul.f32.gmra.mxu0 %v89
  %v231 = vpop.f32.mrf.mxu0
  %v232 = vadd.f32 %v129, %v231
  %233 = vmatmul.f32.gmra.mxu0 %v91
  %v234 = vpop.f32.mrf.mxu0
  %v235 = vadd.f32 %v129, %v234
  %236 = vmatmul.f32.gmra.mxu0 %v93
  %v237 = vpop.f32.mrf.mxu0
  %v238 = vadd.f32 %v129, %v237
  %239 = vmatmul.f32.gmra.mxu0 %v95
  %v240 = vpop.f32.mrf.mxu0
  %v241 = vadd.f32 %v129, %v240
  %242 = vdwg.mxu0
  %243 = vmatpush.msra.mxu0 %v128
  %244 = vmatpush.msra.mxu0 %v127
  %245 = vmatpush.msra.mxu0 %v126
  %246 = vmatpush.msra.mxu0 %v125
  %247 = vmatpush.msra.mxu0 %v124
  %248 = vmatpush.msra.mxu0 %v123
  %249 = vmatpush.msra.mxu0 %v122
  %250 = vmatpush.msra.mxu0 %v121
  %251 = vmatpush.msra.mxu0 %v120
  %252 = vmatpush.msra.mxu0 %v119
  %253 = vmatpush.msra.mxu0 %v118
  %254 = vmatpush.msra.mxu0 %v117
  %255 = vmatpush.msra.mxu0 %v116
  %256 = vmatpush.msra.mxu0 %v115
  %257 = vmatpush.msra.mxu0 %v114
  %258 = vmatpush.msra.mxu0 %v113
  %259 = vmatmul.f32.gmra.mxu0 %v34
  %v260 = vpop.f32.mrf.mxu0
  %v261 = vadd.f32 %v148, %v260
  %262 = vmatmul.f32.gmra.mxu0 %v36
  %v263 = vpop.f32.mrf.mxu0
  %v264 = vadd.f32 %v151, %v263
  %265 = vmatmul.f32.gmra.mxu0 %v38
  %v266 = vpop.f32.mrf.mxu0
  %v267 = vadd.f32 %v154, %v266
  %268 = vmatmul.f32.gmra.mxu0 %v40
  %v269 = vpop.f32.mrf.mxu0
  %v270 = vadd.f32 %v157, %v269
  %271 = vmatmul.f32.gmra.mxu0 %v42
  %v272 = vpop.f32.mrf.mxu0
  %v273 = vadd.f32 %v160, %v272
  %274 = vmatmul.f32.gmra.mxu0 %v44
  %v275 = vpop.f32.mrf.mxu0
  %v276 = vadd.f32 %v163, %v275
  %277 = vmatmul.f32.gmra.mxu0 %v46
  %v278 = vpop.f32.mrf.mxu0
  %v279 = vadd.f32 %v166, %v278
  %280 = vmatmul.f32.gmra.mxu0 %v48
  %v281 = vpop.f32.mrf.mxu0
  %v282 = vadd.f32 %v169, %v281
  %283 = vmatmul.f32.gmra.mxu0 %v50
  %v284 = vpop.f32.mrf.mxu0
  %v285 = vadd.f32 %v172, %v284
  %286 = vmatmul.f32.gmra.mxu0 %v52
  %v287 = vpop.f32.mrf.mxu0
  %v288 = vadd.f32 %v175, %v287
  %289 = vmatmul.f32.gmra.mxu0 %v54
  %v290 = vpop.f32.mrf.mxu0
  %v291 = vadd.f32 %v178, %v290
  %292 = vmatmul.f32.gmra.mxu0 %v56
  %v293 = vpop.f32.mrf.mxu0
  %v294 = vadd.f32 %v181, %v293
  %295 = vmatmul.f32.gmra.mxu0 %v58
  %v296 = vpop.f32.mrf.mxu0
  %v297 = vadd.f32 %v184, %v296
  %298 = vmatmul.f32.gmra.mxu0 %v60
  %v299 = vpop.f32.mrf.mxu0
  %v300 = vadd.f32 %v187, %v299
  %301 = vmatmul.f32.gmra.mxu0 %v62
  %v302 = vpop.f32.mrf.mxu0
  %v303 = vadd.f32 %v190, %v302
  %304 = vmatmul.f32.gmra.mxu0 %v64
  %v305 = vpop.f32.mrf.mxu0
  %v306 = vadd.f32 %v193, %v305
  %307 = vmatmul.f32.gmra.mxu0 %v66
  %v308 = vpop.f32.mrf.mxu0
  %v309 = vadd.f32 %v196, %v308
  %310 = vmatmul.f32.gmra.mxu0 %v68
  %v311 = vpop.f32.mrf.mxu0
  %v312 = vadd.f32 %v199, %v311
  %313 = vmatmul.f32.gmra.mxu0 %v70
  %v314 = vpop.f32.mrf.mxu0
  %v315 = vadd.f32 %v202, %v314
  %316 = vmatmul.f32.gmra.mxu0 %v72
  %v317 = vpop.f32.mrf.mxu0
  %v318 = vadd.f32 %v205, %v317
  %319 = vmatmul.f32.gmra.mxu0 %v74
  %v320 = vpop.f32.mrf.mxu0
  %v321 = vadd.f32 %v208, %v320
  %322 = vmatmul.f32.gmra.mxu0 %v76
  %v323 = vpop.f32.mrf.mxu0
  %v324 = vadd.f32 %v211, %v323
  %325 = vmatmul.f32.gmra.mxu0 %v78
  %v326 = vpop.f32.mrf.mxu0
  %v327 = vadd.f32 %v214, %v326
  %328 = vmatmul.f32.gmra.mxu0 %v80
  %v329 = vpop.f32.mrf.mxu0
  %v330 = vadd.f32 %v217, %v329
  %331 = vmatmul.f32.gmra.mxu0 %v82
  %v332 = vpop.f32.mrf.mxu0
  %v333 = vadd.f32 %v220, %v332
  %334 = vmatmul.f32.gmra.mxu0 %v84
  %v335 = vpop.f32.mrf.mxu0
  %v336 = vadd.f32 %v223, %v335
  %337 = vmatmul.f32.gmra.mxu0 %v86
  %v338 = vpop.f32.mrf.mxu0
  %v339 = vadd.f32 %v226, %v338
  %340 = vmatmul.f32.gmra.mxu0 %v88
  %v341 = vpop.f32.mrf.mxu0
  %v342 = vadd.f32 %v229, %v341
  %343 = vmatmul.f32.gmra.mxu0 %v90
  %v344 = vpop.f32.mrf.mxu0
  %v345 = vadd.f32 %v232, %v344
  %346 = vmatmul.f32.gmra.mxu0 %v92
  %v347 = vpop.f32.mrf.mxu0
  %v348 = vadd.f32 %v235, %v347
  %349 = vmatmul.f32.gmra.mxu0 %v94
  %v350 = vpop.f32.mrf.mxu0
  %v351 = vadd.f32 %v238, %v350
  %352 = vmatmul.f32.gmra.mxu0 %v96
  %v353 = vpop.f32.mrf.mxu0
  %v354 = vadd.f32 %v241, %v353
  %355 = vdwg.mxu0
  %v356 = vmax.f32 %v261, 0.0
  %v357 = vmax.f32 %v264, 0.0
  %v358 = vmax.f32 %v267, 0.0
  %v359 = vmax.f32 %v270, 0.0
  %v360 = vmax.f32 %v273, 0.0
  %v361 = vmax.f32 %v276, 0.0
  %v362 = vmax.f32 %v279, 0.0
  %v363 = vmax.f32 %v282, 0.0
  %v364 = vmax.f32 %v285, 0.0
  %v365 = vmax.f32 %v288, 0.0
  %v366 = vmax.f32 %v291, 0.0
  %v367 = vmax.f32 %v294, 0.0
  %v368 = vmax.f32 %v297, 0.0
  %v369 = vmax.f32 %v300, 0.0
  %v370 = vmax.f32 %v303, 0.0
  %v371 = vmax.f32 %v306, 0.0
  %v372 = vmax.f32 %v309, 0.0
  %v373 = vmax.f32 %v312, 0.0
  %v374 = vmax.f32 %v315, 0.0
  %v375 = vmax.f32 %v318, 0.0
  %v376 = vmax.f32 %v321, 0.0
  %v377 = vmax.f32 %v324, 0.0
  %v378 = vmax.f32 %v327, 0.0
  %v379 = vmax.f32 %v330, 0.0
  %v380 = vmax.f32 %v333, 0.0
  %v381 = vmax.f32 %v336, 0.0
  %v382 = vmax.f32 %v339, 0.0
  %v383 = vmax.f32 %v342, 0.0
  %v384 = vmax.f32 %v345, 0.0
  %v385 = vmax.f32 %v348, 0.0
  %v386 = vmax.f32 %v351, 0.0
  %v387 = vmax.f32 %v354, 0.0
  %388 = vmatpush.msra.mxu0 %v371
  %389 = vmatpush.msra.mxu0 %v370
  %390 = vmatpush.msra.mxu0 %v369
  %391 = vmatpush.msra.mxu0 %v368
  %392 = vmatpush.msra.mxu0 %v367
  %393 = vmatpush.msra.mxu0 %v366
  %394 = vmatpush.msra.mxu0 %v365
  %395 = vmatpush.msra.mxu0 %v364
  %396 = vmatpush.msra.mxu0 %v363
  %397 = vmatpush.msra.mxu0 %v362
  %398 = vmatpush.msra.mxu0 %v361
  %399 = vmatpush.msra.mxu0 %v360
  %400 = vmatpush.msra.mxu0 %v359
  %401 = vmatpush.msra.mxu0 %v358
  %402 = vmatpush.msra.mxu0 %v357
  %403 = vmatpush.msra.mxu0 %v356
  %404 = vmatmul.f32.gmra.mxu0 %v33
  %v405 = vpop.f32.mrf.mxu0
  %v406 = vadd.f32 0.0, %v405
  %407 = vmatmul.f32.gmra.mxu0 %v35
  %v408 = vpop.f32.mrf.mxu0
  %v409 = vadd.f32 0.0, %v408
  %410 = vmatmul.f32.gmra.mxu0 %v37
  %v411 = vpop.f32.mrf.mxu0
  %v412 = vadd.f32 0.0, %v411
  %413 = vmatmul.f32.gmra.mxu0 %v39
  %v414 = vpop.f32.mrf.mxu0
  %v415 = vadd.f32 0.0, %v414
  %416 = vmatmul.f32.gmra.mxu0 %v41
  %v417 = vpop.f32.mrf.mxu0
  %v418 = vadd.f32 0.0, %v417
  %419 = vmatmul.f32.gmra.mxu0 %v43
  %v420 = vpop.f32.mrf.mxu0
  %v421 = vadd.f32 0.0, %v420
  %422 = vmatmul.f32.gmra.mxu0 %v45
  %v423 = vpop.f32.mrf.mxu0
  %v424 = vadd.f32 0.0, %v423
  %425 = vmatmul.f32.gmra.mxu0 %v47
  %v426 = vpop.f32.mrf.mxu0
  %v427 = vadd.f32 0.0, %v426
  %428 = vmatmul.f32.gmra.mxu0 %v49
  %v429 = vpop.f32.mrf.mxu0
  %v430 = vadd.f32 0.0, %v429
  %431 = vmatmul.f32.gmra.mxu0 %v51
  %v432 = vpop.f32.mrf.mxu0
  %v433 = vadd.f32 0.0, %v432
  %434 = vmatmul.f32.gmra.mxu0 %v53
  %v435 = vpop.f32.mrf.mxu0
  %v436 = vadd.f32 0.0, %v435
  %437 = vmatmul.f32.gmra.mxu0 %v55
  %v438 = vpop.f32.mrf.mxu0
  %v439 = vadd.f32 0.0, %v438
  %440 = vmatmul.f32.gmra.mxu0 %v57
  %v441 = vpop.f32.mrf.mxu0
  %v442 = vadd.f32 0.0, %v441
  %443 = vmatmul.f32.gmra.mxu0 %v59
  %v444 = vpop.f32.mrf.mxu0
  %v445 = vadd.f32 0.0, %v444
  %446 = vmatmul.f32.gmra.mxu0 %v61
  %v447 = vpop.f32.mrf.mxu0
  %v448 = vadd.f32 0.0, %v447
  %449 = vmatmul.f32.gmra.mxu0 %v63
  %v450 = vpop.f32.mrf.mxu0
  %v451 = vadd.f32 0.0, %v450
  %452 = vmatmul.f32.gmra.mxu0 %v65
  %v453 = vpop.f32.mrf.mxu0
  %v454 = vadd.f32 0.0, %v453
  %455 = vmatmul.f32.gmra.mxu0 %v67
  %v456 = vpop.f32.mrf.mxu0
  %v457 = vadd.f32 0.0, %v456
  %458 = vmatmul.f32.gmra.mxu0 %v69
  %v459 = vpop.f32.mrf.mxu0
  %v460 = vadd.f32 0.0, %v459
  %461 = vmatmul.f32.gmra.mxu0 %v71
  %v462 = vpop.f32.mrf.mxu0
  %v463 = vadd.f32 0.0, %v462
  %464 = vmatmul.f32.gmra.mxu0 %v73
  %v465 = vpop.f32.mrf.mxu0
  %v466 = vadd.f32 0.0, %v465
  %467 = vmatmul.f32.gmra.mxu0 %v75
  %v468 = vpop.f32.mrf.mxu0
  %v469 = vadd.f32 0.0, %v468
  %470 = vmatmul.f32.gmra.mxu0 %v77
  %v471 = vpop.f32.mrf.mxu0
  %v472 = vadd.f32 0.0, %v471
  %473 = vmatmul.f32.gmra.mxu0 %v79
  %v474 = vpop.f32.mrf.mxu0
  %v475 = vadd.f32 0.0, %v474
  %476 = vmatmul.f32.gmra.mxu0 %v81
  %v477 = vpop.f32.mrf.mxu0
  %v478 = vadd.f32 0.0, %v477
  %479 = vmatmul.f32.gmra.mxu0 %v83
  %v480 = vpop.f32.mrf.mxu0
  %v481 = vadd.f32 0.0, %v480
  %482 = vmatmul.f32.gmra.mxu0 %v85
  %v483 = vpop.f32.mrf.mxu0
  %v484 = vadd.f32 0.0, %v483
  %485 = vmatmul.f32.gmra.mxu0 %v87
  %v486 = vpop.f32.mrf.mxu0
  %v487 = vadd.f32 0.0, %v486
  %488 = vmatmul.f32.gmra.mxu0 %v89
  %v489 = vpop.f32.mrf.mxu0
  %v490 = vadd.f32 0.0, %v489
  %491 = vmatmul.f32.gmra.mxu0 %v91
  %v492 = vpop.f32.mrf.mxu0
  %v493 = vadd.f32 0.0, %v492
  %494 = vmatmul.f32.gmra.mxu0 %v93
  %v495 = vpop.f32.mrf.mxu0
  %v496 = vadd.f32 0.0, %v495
  %497 = vmatmul.f32.gmra.mxu0 %v95
  %v498 = vpop.f32.mrf.mxu0
  %v499 = vadd.f32 0.0, %v498
  %500 = vdwg.mxu0
  %501 = vmatpush.msra.mxu0 %v387
  %502 = vmatpush.msra.mxu0 %v386
  %503 = vmatpush.msra.mxu0 %v385
  %504 = vmatpush.msra.mxu0 %v384
  %505 = vmatpush.msra.mxu0 %v383
  %506 = vmatpush.msra.mxu0 %v382
  %507 = vmatpush.msra.mxu0 %v381
  %508 = vmatpush.msra.mxu0 %v380
  %509 = vmatpush.msra.mxu0 %v379
  %510 = vmatpush.msra.mxu0 %v378
  %511 = vmatpush.msra.mxu0 %v377
  %512 = vmatpush.msra.mxu0 %v376
  %513 = vmatpush.msra.mxu0 %v375
  %514 = vmatpush.msra.mxu0 %v374
  %515 = vmatpush.msra.mxu0 %v373
  %516 = vmatpush.msra.mxu0 %v372
  %517 = vmatmul.f32.gmra.mxu0 %v34
  %v518 = vpop.f32.mrf.mxu0
  %v519 = vadd.f32 %v406, %v518
  %520 = vmatmul.f32.gmra.mxu0 %v36
  %v521 = vpop.f32.mrf.mxu0
  %v522 = vadd.f32 %v409, %v521
  %523 = vmatmul.f32.gmra.mxu0 %v38
  %v524 = vpop.f32.mrf.mxu0
  %v525 = vadd.f32 %v412, %v524
  %526 = vmatmul.f32.gmra.mxu0 %v40
  %v527 = vpop.f32.mrf.mxu0
  %v528 = vadd.f32 %v415, %v527
  %529 = vmatmul.f32.gmra.mxu0 %v42
  %v530 = vpop.f32.mrf.mxu0
  %v531 = vadd.f32 %v418, %v530
  %532 = vmatmul.f32.gmra.mxu0 %v44
  %v533 = vpop.f32.mrf.mxu0
  %v534 = vadd.f32 %v421, %v533
  %535 = vmatmul.f32.gmra.mxu0 %v46
  %v536 = vpop.f32.mrf.mxu0
  %v537 = vadd.f32 %v424, %v536
  %538 = vmatmul.f32.gmra.mxu0 %v48
  %v539 = vpop.f32.mrf.mxu0
  %v540 = vadd.f32 %v427, %v539
  %541 = vmatmul.f32.gmra.mxu0 %v50
  %v542 = vpop.f32.mrf.mxu0
  %v543 = vadd.f32 %v430, %v542
  %544 = vmatmul.f32.gmra.mxu0 %v52
  %v545 = vpop.f32.mrf.mxu0
  %v546 = vadd.f32 %v433, %v545
  %547 = vmatmul.f32.gmra.mxu0 %v54
  %v548 = vpop.f32.mrf.mxu0
  %v549 = vadd.f32 %v436, %v548
  %550 = vmatmul.f32.gmra.mxu0 %v56
  %v551 = vpop.f32.mrf.mxu0
  %v552 = vadd.f32 %v439, %v551
  %553 = vmatmul.f32.gmra.mxu0 %v58
  %v554 = vpop.f32.mrf.mxu0
  %v555 = vadd.f32 %v442, %v554
  %556 = vmatmul.f32.gmra.mxu0 %v60
  %v557 = vpop.f32.mrf.mxu0
  %v558 = vadd.f32 %v445, %v557
  %559 = vmatmul.f32.gmra.mxu0 %v62
  %v560 = vpop.f32.mrf.mxu0
  %v561 = vadd.f32 %v448, %v560
  %562 = vmatmul.f32.gmra.mxu0 %v64
  %v563 = vpop.f32.mrf.mxu0
  %v564 = vadd.f32 %v451, %v563
  %565 = vmatmul.f32.gmra.mxu0 %v66
  %v566 = vpop.f32.mrf.mxu0
  %v567 = vadd.f32 %v454, %v566
  %568 = vmatmul.f32.gmra.mxu0 %v68
  %v569 = vpop.f32.mrf.mxu0
  %v570 = vadd.f32 %v457, %v569
  %571 = vmatmul.f32.gmra.mxu0 %v70
  %v572 = vpop.f32.mrf.mxu0
  %v573 = vadd.f32 %v460, %v572
  %574 = vmatmul.f32.gmra.mxu0 %v72
  %v575 = vpop.f32.mrf.mxu0
  %v576 = vadd.f32 %v463, %v575
  %577 = vmatmul.f32.gmra.mxu0 %v74
  %v578 = vpop.f32.mrf.mxu0
  %v579 = vadd.f32 %v466, %v578
  %580 = vmatmul.f32.gmra.mxu0 %v76
  %v581 = vpop.f32.mrf.mxu0
  %v582 = vadd.f32 %v469, %v581
  %583 = vmatmul.f32.gmra.mxu0 %v78
  %v584 = vpop.f32.mrf.mxu0
  %v585 = vadd.f32 %v472, %v584
  %586 = vmatmul.f32.gmra.mxu0 %v80
  %v587 = vpop.f32.mrf.mxu0
  %v588 = vadd.f32 %v475, %v587
  %589 = vmatmul.f32.gmra.mxu0 %v82
  %v590 = vpop.f32.mrf.mxu0
  %v591 = vadd.f32 %v478, %v590
  %592 = vmatmul.f32.gmra.mxu0 %v84
  %v593 = vpop.f32.mrf.mxu0
  %v594 = vadd.f32 %v481, %v593
  %595 = vmatmul.f32.gmra.mxu0 %v86
  %v596 = vpop.f32.mrf.mxu0
  %v597 = vadd.f32 %v484, %v596
  %598 = vmatmul.f32.gmra.mxu0 %v88
  %v599 = vpop.f32.mrf.mxu0
  %v600 = vadd.f32 %v487, %v599
  %601 = vmatmul.f32.gmra.mxu0 %v90
  %v602 = vpop.f32.mrf.mxu0
  %v603 = vadd.f32 %v490, %v602
  %604 = vmatmul.f32.gmra.mxu0 %v92
  %v605 = vpop.f32.mrf.mxu0
  %v606 = vadd.f32 %v493, %v605
  %607 = vmatmul.f32.gmra.mxu0 %v94
  %v608 = vpop.f32.mrf.mxu0
  %v609 = vadd.f32 %v496, %v608
  %610 = vmatmul.f32.gmra.mxu0 %v96
  %v611 = vpop.f32.mrf.mxu0
  %v612 = vadd.f32 %v499, %v611
  %613 = vdwg.mxu0
  %v614 = vperm.slane %v25, 0
  %vm615 = vcmask 261120
  %v617 = vsel %vm615, %v519, 0
  %v620 = vsel %vm615, %v522, 0
  %v623 = vsel %vm615, %v525, 0
  %v626 = vsel %vm615, %v528, 0
  %v629 = vsel %vm615, %v531, 0
  %v632 = vsel %vm615, %v534, 0
  %v635 = vsel %vm615, %v537, 0
  %v638 = vsel %vm615, %v540, 0
  %v641 = vsel %vm615, %v543, 0
  %v644 = vsel %vm615, %v546, 0
  %v647 = vsel %vm615, %v549, 0
  %v650 = vsel %vm615, %v552, 0
  %v653 = vsel %vm615, %v555, 0
  %v656 = vsel %vm615, %v558, 0
  %v659 = vsel %vm615, %v561, 0
  %v662 = vsel %vm615, %v564, 0
  %v665 = vsel %vm615, %v567, 0
  %v668 = vsel %vm615, %v570, 0
  %v671 = vsel %vm615, %v573, 0
  %v674 = vsel %vm615, %v576, 0
  %v677 = vsel %vm615, %v579, 0
  %v680 = vsel %vm615, %v582, 0
  %v683 = vsel %vm615, %v585, 0
  %v686 = vsel %vm615, %v588, 0
  %v689 = vsel %vm615, %v591, 0
  %v692 = vsel %vm615, %v594, 0
  %v695 = vsel %vm615, %v597, 0
  %v698 = vsel %vm615, %v600, 0
  %v701 = vsel %vm615, %v603, 0
  %v704 = vsel %vm615, %v606, 0
  %v707 = vsel %vm615, %v609, 0
  %v710 = vsel %vm615, %v612, 0
  %712 = vmatpush.msra.mxu0 0.0
  %713 = vmatpush.msra.mxu0 0.0
  %714 = vmatpush.msra.mxu0 0.0
  %715 = vmatpush.msra.mxu0 0.0
  %716 = vmatpush.msra.mxu0 0.0
  %717 = vmatpush.msra.mxu0 0.0
  %718 = vmatpush.msra.mxu0 0.0
  %719 = vmatpush.msra.mxu0 0.0
  %720 = vmatpush.msra.mxu0 0.0
  %721 = vmatpush.msra.mxu0 0.0
  %722 = vmatpush.msra.mxu0 0.0
  %723 = vmatpush.msra.mxu0 0.0
  %724 = vmatpush.msra.mxu0 %v24
  %725 = vmatpush.msra.mxu0 %v23
  %726 = vmatpush.msra.mxu0 %v22
  %727 = vmatpush.msra.mxu0 %v21
  %728 = vmatmul.f32.gmra.mxu0 %v617
  %v729 = vpop.f32.mrf.mxu0
  %v730 = vadd.f32 %v614, %v729
  %731 = vmatmul.f32.gmra.mxu0 %v620
  %v732 = vpop.f32.mrf.mxu0
  %v733 = vadd.f32 %v614, %v732
  %734 = vmatmul.f32.gmra.mxu0 %v623
  %v735 = vpop.f32.mrf.mxu0
  %v736 = vadd.f32 %v614, %v735
  %737 = vmatmul.f32.gmra.mxu0 %v626
  %v738 = vpop.f32.mrf.mxu0
  %v739 = vadd.f32 %v614, %v738
  %740 = vmatmul.f32.gmra.mxu0 %v629
  %v741 = vpop.f32.mrf.mxu0
  %v742 = vadd.f32 %v614, %v741
  %743 = vmatmul.f32.gmra.mxu0 %v632
  %v744 = vpop.f32.mrf.mxu0
  %v745 = vadd.f32 %v614, %v744
  %746 = vmatmul.f32.gmra.mxu0 %v635
  %v747 = vpop.f32.mrf.mxu0
  %v748 = vadd.f32 %v614, %v747
  %749 = vmatmul.f32.gmra.mxu0 %v638
  %v750 = vpop.f32.mrf.mxu0
  %v751 = vadd.f32 %v614, %v750
  %752 = vmatmul.f32.gmra.mxu0 %v641
  %v753 = vpop.f32.mrf.mxu0
  %v754 = vadd.f32 %v614, %v753
  %755 = vmatmul.f32.gmra.mxu0 %v644
  %v756 = vpop.f32.mrf.mxu0
  %v757 = vadd.f32 %v614, %v756
  %758 = vmatmul.f32.gmra.mxu0 %v647
  %v759 = vpop.f32.mrf.mxu0
  %v760 = vadd.f32 %v614, %v759
  %761 = vmatmul.f32.gmra.mxu0 %v650
  %v762 = vpop.f32.mrf.mxu0
  %v763 = vadd.f32 %v614, %v762
  %764 = vmatmul.f32.gmra.mxu0 %v653
  %v765 = vpop.f32.mrf.mxu0
  %v766 = vadd.f32 %v614, %v765
  %767 = vmatmul.f32.gmra.mxu0 %v656
  %v768 = vpop.f32.mrf.mxu0
  %v769 = vadd.f32 %v614, %v768
  %770 = vmatmul.f32.gmra.mxu0 %v659
  %v771 = vpop.f32.mrf.mxu0
  %v772 = vadd.f32 %v614, %v771
  %773 = vmatmul.f32.gmra.mxu0 %v662
  %v774 = vpop.f32.mrf.mxu0
  %v775 = vadd.f32 %v614, %v774
  %776 = vmatmul.f32.gmra.mxu0 %v665
  %v777 = vpop.f32.mrf.mxu0
  %v778 = vadd.f32 %v614, %v777
  %779 = vmatmul.f32.gmra.mxu0 %v668
  %v780 = vpop.f32.mrf.mxu0
  %v781 = vadd.f32 %v614, %v780
  %782 = vmatmul.f32.gmra.mxu0 %v671
  %v783 = vpop.f32.mrf.mxu0
  %v784 = vadd.f32 %v614, %v783
  %785 = vmatmul.f32.gmra.mxu0 %v674
  %v786 = vpop.f32.mrf.mxu0
  %v787 = vadd.f32 %v614, %v786
  %788 = vmatmul.f32.gmra.mxu0 %v677
  %v789 = vpop.f32.mrf.mxu0
  %v790 = vadd.f32 %v614, %v789
  %791 = vmatmul.f32.gmra.mxu0 %v680
  %v792 = vpop.f32.mrf.mxu0
  %v793 = vadd.f32 %v614, %v792
  %794 = vmatmul.f32.gmra.mxu0 %v683
  %v795 = vpop.f32.mrf.mxu0
  %v796 = vadd.f32 %v614, %v795
  %797 = vmatmul.f32.gmra.mxu0 %v686
  %v798 = vpop.f32.mrf.mxu0
  %v799 = vadd.f32 %v614, %v798
  %800 = vmatmul.f32.gmra.mxu0 %v689
  %v801 = vpop.f32.mrf.mxu0
  %v802 = vadd.f32 %v614, %v801
  %803 = vmatmul.f32.gmra.mxu0 %v692
  %v804 = vpop.f32.mrf.mxu0
  %v805 = vadd.f32 %v614, %v804
  %806 = vmatmul.f32.gmra.mxu0 %v695
  %v807 = vpop.f32.mrf.mxu0
  %v808 = vadd.f32 %v614, %v807
  %809 = vmatmul.f32.gmra.mxu0 %v698
  %v810 = vpop.f32.mrf.mxu0
  %v811 = vadd.f32 %v614, %v810
  %812 = vmatmul.f32.gmra.mxu0 %v701
  %v813 = vpop.f32.mrf.mxu0
  %v814 = vadd.f32 %v614, %v813
  %815 = vmatmul.f32.gmra.mxu0 %v704
  %v816 = vpop.f32.mrf.mxu0
  %v817 = vadd.f32 %v614, %v816
  %818 = vmatmul.f32.gmra.mxu0 %v707
  %v819 = vpop.f32.mrf.mxu0
  %v820 = vadd.f32 %v614, %v819
  %821 = vmatmul.f32.gmra.mxu0 %v710
  %v822 = vpop.f32.mrf.mxu0
  %v823 = vadd.f32 %v614, %v822
  %824 = vdwg.mxu0
  %v825 = vmax.f32 %v730, 0.0
  %v826 = vmax.f32 %v733, 0.0
  %v827 = vmax.f32 %v736, 0.0
  %v828 = vmax.f32 %v739, 0.0
  %v829 = vmax.f32 %v742, 0.0
  %v830 = vmax.f32 %v745, 0.0
  %v831 = vmax.f32 %v748, 0.0
  %v832 = vmax.f32 %v751, 0.0
  %v833 = vmax.f32 %v754, 0.0
  %v834 = vmax.f32 %v757, 0.0
  %v835 = vmax.f32 %v760, 0.0
  %v836 = vmax.f32 %v763, 0.0
  %v837 = vmax.f32 %v766, 0.0
  %v838 = vmax.f32 %v769, 0.0
  %v839 = vmax.f32 %v772, 0.0
  %v840 = vmax.f32 %v775, 0.0
  %v841 = vmax.f32 %v778, 0.0
  %v842 = vmax.f32 %v781, 0.0
  %v843 = vmax.f32 %v784, 0.0
  %v844 = vmax.f32 %v787, 0.0
  %v845 = vmax.f32 %v790, 0.0
  %v846 = vmax.f32 %v793, 0.0
  %v847 = vmax.f32 %v796, 0.0
  %v848 = vmax.f32 %v799, 0.0
  %v849 = vmax.f32 %v802, 0.0
  %v850 = vmax.f32 %v805, 0.0
  %v851 = vmax.f32 %v808, 0.0
  %v852 = vmax.f32 %v811, 0.0
  %v853 = vmax.f32 %v814, 0.0
  %v854 = vmax.f32 %v817, 0.0
  %v855 = vmax.f32 %v820, 0.0
  %v856 = vmax.f32 %v823, 0.0
  %v857 = vld [vmem:[%s3] sm:$0xff]
  %v858 = vld [vmem:[%s3 + $0x8] sm:$0xff]
  %v859 = vld [vmem:[%s3 + $0x10] sm:$0xff]
  %v860 = vld [vmem:[%s3 + $0x18] sm:$0xff]
  %v861 = vld [vmem:[%s3 + $0x20] sm:$0xff]
  %v862 = vld [vmem:[%s3 + $0x28] sm:$0xff]
  %v863 = vld [vmem:[%s3 + $0x30] sm:$0xff]
  %v864 = vld [vmem:[%s3 + $0x38] sm:$0xff]
  %865 = vmatpush.msra.mxu0 %v840
  %866 = vmatpush.msra.mxu0 %v839
  %867 = vmatpush.msra.mxu0 %v838
  %868 = vmatpush.msra.mxu0 %v837
  %869 = vmatpush.msra.mxu0 %v836
  %870 = vmatpush.msra.mxu0 %v835
  %871 = vmatpush.msra.mxu0 %v834
  %872 = vmatpush.msra.mxu0 %v833
  %873 = vmatpush.msra.mxu0 %v832
  %874 = vmatpush.msra.mxu0 %v831
  %875 = vmatpush.msra.mxu0 %v830
  %876 = vmatpush.msra.mxu0 %v829
  %877 = vmatpush.msra.mxu0 %v828
  %878 = vmatpush.msra.mxu0 %v827
  %879 = vmatpush.msra.mxu0 %v826
  %880 = vmatpush.msra.mxu0 %v825
  %881 = vmatmul.f32.gmra.mxu0 %v857
  %v882 = vpop.f32.mrf.mxu0
  %v883 = vadd.f32 0.0, %v882
  %884 = vmatmul.f32.gmra.mxu0 %v859
  %v885 = vpop.f32.mrf.mxu0
  %v886 = vadd.f32 0.0, %v885
  %887 = vmatmul.f32.gmra.mxu0 %v861
  %v888 = vpop.f32.mrf.mxu0
  %v889 = vadd.f32 0.0, %v888
  %890 = vmatmul.f32.gmra.mxu0 %v863
  %v891 = vpop.f32.mrf.mxu0
  %v892 = vadd.f32 0.0, %v891
  %893 = vdwg.mxu0
  %894 = vmatpush.msra.mxu0 %v856
  %895 = vmatpush.msra.mxu0 %v855
  %896 = vmatpush.msra.mxu0 %v854
  %897 = vmatpush.msra.mxu0 %v853
  %898 = vmatpush.msra.mxu0 %v852
  %899 = vmatpush.msra.mxu0 %v851
  %900 = vmatpush.msra.mxu0 %v850
  %901 = vmatpush.msra.mxu0 %v849
  %902 = vmatpush.msra.mxu0 %v848
  %903 = vmatpush.msra.mxu0 %v847
  %904 = vmatpush.msra.mxu0 %v846
  %905 = vmatpush.msra.mxu0 %v845
  %906 = vmatpush.msra.mxu0 %v844
  %907 = vmatpush.msra.mxu0 %v843
  %908 = vmatpush.msra.mxu0 %v842
  %909 = vmatpush.msra.mxu0 %v841
  %910 = vmatmul.f32.gmra.mxu0 %v858
  %v911 = vpop.f32.mrf.mxu0
  %v912 = vadd.f32 %v883, %v911
  %913 = vmatmul.f32.gmra.mxu0 %v860
  %v914 = vpop.f32.mrf.mxu0
  %v915 = vadd.f32 %v886, %v914
  %916 = vmatmul.f32.gmra.mxu0 %v862
  %v917 = vpop.f32.mrf.mxu0
  %v918 = vadd.f32 %v889, %v917
  %919 = vmatmul.f32.gmra.mxu0 %v864
  %v920 = vpop.f32.mrf.mxu0
  %v921 = vadd.f32 %v892, %v920
  %922 = vdwg.mxu0
  %v923 = vld [vmem:[%s2] sm:$0xff]
  %v924 = vld [vmem:[%s2 + $0x8] sm:$0xff]
  %v925 = vld [vmem:[%s2 + $0x10] sm:$0xff]
  %v926 = vld [vmem:[%s2 + $0x18] sm:$0xff]
  %vm927 = vcmask 31744
  %v929 = vsel %vm927, %v923, 0
  %v932 = vsel %vm927, %v924, 0
  %v935 = vsel %vm927, %v925, 0
  %v938 = vsel %vm927, %v926, 0
  %vm940 = vcmask 1043456
  %v942 = vsel %vm940, %v28, 0
  %944 = vmatpush.msra.mxu0 0.0
  %945 = vmatpush.msra.mxu0 0.0
  %946 = vmatpush.msra.mxu0 0.0
  %947 = vmatpush.msra.mxu0 0.0
  %948 = vmatpush.msra.mxu0 0.0
  %949 = vmatpush.msra.mxu0 0.0
  %950 = vmatpush.msra.mxu0 0.0
  %951 = vmatpush.msra.mxu0 0.0
  %952 = vmatpush.msra.mxu0 0.0
  %953 = vmatpush.msra.mxu0 0.0
  %954 = vmatpush.msra.mxu0 0.0
  %955 = vmatpush.msra.mxu0 0.0
  %956 = vmatpush.msra.mxu0 0.0
  %957 = vmatpush.msra.mxu0 0.0
  %958 = vmatpush.msra.mxu0 0.0
  %959 = vmatpush.msra.mxu0 %v942
  %960 = vmatmul.f32.gmra.mxu0 %v929
  %v961 = vpop.f32.mrf.mxu0
  %v962 = vadd.f32 0.0, %v961
  %963 = vmatmul.f32.gmra.mxu0 %v932
  %v964 = vpop.f32.mrf.mxu0
  %v965 = vadd.f32 0.0, %v964
  %966 = vmatmul.f32.gmra.mxu0 %v935
  %v967 = vpop.f32.mrf.mxu0
  %v968 = vadd.f32 0.0, %v967
  %969 = vmatmul.f32.gmra.mxu0 %v938
  %v970 = vpop.f32.mrf.mxu0
  %v971 = vadd.f32 0.0, %v970
  %972 = vdwg.mxu0
  %vm973 = vcmask 130048
  %v975 = vsel %vm973, %v912, 0
  %v978 = vsel %vm973, %v915, 0
  %v981 = vsel %vm973, %v918, 0
  %v984 = vsel %vm973, %v921, 0
  %986 = vmatpush.msra.mxu0 0.0
  %987 = vmatpush.msra.mxu0 0.0
  %988 = vmatpush.msra.mxu0 0.0
  %989 = vmatpush.msra.mxu0 0.0
  %990 = vmatpush.msra.mxu0 0.0
  %991 = vmatpush.msra.mxu0 0.0
  %992 = vmatpush.msra.mxu0 0.0
  %993 = vmatpush.msra.mxu0 0.0
  %994 = vmatpush.msra.mxu0 0.0
  %995 = vmatpush.msra.mxu0 0.0
  %996 = vmatpush.msra.mxu0 0.0
  %997 = vmatpush.msra.mxu0 0.0
  %998 = vmatpush.msra.mxu0 0.0
  %999 = vmatpush.msra.mxu0 0.0
  %1000 = vmatpush.msra.mxu0 %v27
  %1001 = vmatpush.msra.mxu0 %v26
  %1002 = vmatmul.f32.gmra.mxu0 %v975
  %v1003 = vpop.f32.mrf.mxu0
  %v1004 = vadd.f32 %v962, %v1003
  %1005 = vmatmul.f32.gmra.mxu0 %v978
  %v1006 = vpop.f32.mrf.mxu0
  %v1007 = vadd.f32 %v965, %v1006
  %1008 = vmatmul.f32.gmra.mxu0 %v981
  %v1009 = vpop.f32.mrf.mxu0
  %v1010 = vadd.f32 %v968, %v1009
  %1011 = vmatmul.f32.gmra.mxu0 %v984
  %v1012 = vpop.f32.mrf.mxu0
  %v1013 = vadd.f32 %v971, %v1012
  %1014 = vdwg.mxu0
  %v1015 = vperm.slane %v29, 0
  %v1016 = vadd.f32 %v1004, %v1015
  %v1017 = vadd.f32 %v1007, %v1015
  %v1018 = vadd.f32 %v1010, %v1015
  %v1019 = vadd.f32 %v1013, %v1015
  %v1020 = vmax.f32 %v1016, 0.0
  %v1021 = vmax.f32 %v1017, 0.0
  %v1022 = vmax.f32 %v1018, 0.0
  %v1023 = vmax.f32 %v1019, 0.0
  %v1024 = vperm.slane %v32, 0
  %vm1025 = vcmask 80896
  %v1027 = vsel %vm1025, %v1020, 0
  %v1030 = vsel %vm1025, %v1021, 0
  %v1033 = vsel %vm1025, %v1022, 0
  %v1036 = vsel %vm1025, %v1023, 0
  %vm1038 = vcmask 1041408
  %v1040 = vsel %vm1038, %v31, 0
  %1042 = vmatpush.msra.mxu0 0.0
  %1043 = vmatpush.msra.mxu0 0.0
  %1044 = vmatpush.msra.mxu0 0.0
  %1045 = vmatpush.msra.mxu0 0.0
  %1046 = vmatpush.msra.mxu0 0.0
  %1047 = vmatpush.msra.mxu0 0.0
  %1048 = vmatpush.msra.mxu0 0.0
  %1049 = vmatpush.msra.mxu0 0.0
  %1050 = vmatpush.msra.mxu0 0.0
  %1051 = vmatpush.msra.mxu0 0.0
  %1052 = vmatpush.msra.mxu0 0.0
  %1053 = vmatpush.msra.mxu0 0.0
  %1054 = vmatpush.msra.mxu0 0.0
  %1055 = vmatpush.msra.mxu0 0.0
  %1056 = vmatpush.msra.mxu0 %v1040
  %1057 = vmatpush.msra.mxu0 %v30
  %1058 = vmatmul.f32.gmra.mxu0 %v1027
  %v1059 = vpop.f32.mrf.mxu0
  %v1060 = vadd.f32 %v1024, %v1059
  %1061 = vmatmul.f32.gmra.mxu0 %v1030
  %v1062 = vpop.f32.mrf.mxu0
  %v1063 = vadd.f32 %v1024, %v1062
  %1064 = vmatmul.f32.gmra.mxu0 %v1033
  %v1065 = vpop.f32.mrf.mxu0
  %v1066 = vadd.f32 %v1024, %v1065
  %1067 = vmatmul.f32.gmra.mxu0 %v1036
  %v1068 = vpop.f32.mrf.mxu0
  %v1069 = vadd.f32 %v1024, %v1068
  %1070 = vdwg.mxu0
  %vm1071 = vcmask 23552
  %1072 = vst.msk [vmem:[%s5] sm:$0xff] %vm1071, %v1060
  %1073 = vst.msk [vmem:[%s5 + $0x8] sm:$0xff] %vm1071, %v1063
  %1074 = vst.msk [vmem:[%s5 + $0x10] sm:$0xff] %vm1071, %v1066
  %1075 = vst.msk [vmem:[%s5 + $0x18] sm:$0xff] %vm1071, %v1069
  // Predicated region
  $region22: #{net_forward.1} parent=0 // pred_check
    _
  $region23: #{net_forward.1} parent=0 // pred_check_branch
    %1077 = sbr.rel (0) target = $region25
  $region24: #{net_forward.1} parent=0 // pred_region
    _
  $region25: #{net_forward.1} parent=0 // pred_fallthru
    _
  // Predicated region
  $region26: #{net_forward.1} parent=0 // pred_check
    _
  $region27: #{net_forward.1} parent=0 // pred_check_branch
    %1079 = sbr.rel (0) target = $region29
  $region28: #{net_forward.1} parent=0 // pred_region
    _
  $region29: #{net_forward.1} parent=0 // pred_fallthru
    _

</llo_original>
